<compile_context>
chip_gen: v5e
topology: v5e:2x2
jax: 0.10.0
libtpu: 0.0.40
codegen_flags: <defaults>
</compile_context>

<pallas_src>
import functools

import numpy as np
import jax
import jax.numpy as jnp
from jax import lax
from jax.experimental import pallas as pl
from jax.experimental.pallas import tpu as pltpu

NUM_LAYERS = 9
EPS = 1e-5
NEG_SLOPE = 0.2


# --------------------------------------------------------------------------- #
# Host-side tap geometry
# --------------------------------------------------------------------------- #
def _tap_offsets(W: int):
    """Flat-index offset of each of the 9 taps: off = (dy-1)*W + (dx-1)."""
    return tuple((dy - 1) * W + (dx - 1) for dy in range(3) for dx in range(3))


def _build_tap_masks(H: int, W: int) -> jnp.ndarray:
    """(9, H*W, 1) 0/1 masks: mask_t[p]=1 iff the tap's source pixel is inside
    the image (zero-padding of the 3x3 conv).  Also kills circular wrap-around
    of the flat roll across row / image boundaries."""
    ys, xs = np.meshgrid(np.arange(H), np.arange(W), indexing="ij")
    masks = []
    for dy in range(3):
        for dx in range(3):
            ky, kx = dy - 1, dx - 1
            valid = ((ys + ky >= 0) & (ys + ky < H) &
                     (xs + kx >= 0) & (xs + kx < W))
            masks.append(valid.reshape(H * W, 1))
    return jnp.asarray(np.stack(masks, axis=0).astype(np.float32))


@functools.lru_cache(maxsize=1)
def _roll_matches_jnp() -> bool:
    """One-time tiny device probe: pin down pltpu.roll's rotation direction so
    the tap shifts are correct regardless of convention in this jax version."""
    def probe(x_ref, o_ref):
        o_ref[...] = pltpu.roll(x_ref[...], shift=1, axis=0)

    x = jnp.tile(jnp.arange(8, dtype=jnp.float32)[:, None], (1, 128))
    out = pl.pallas_call(
        probe, out_shape=jax.ShapeDtypeStruct((8, 128), jnp.float32))(x)
    v = float(out[0, 0])
    if v == 7.0:
        return True        # out[i] = x[(i - shift) % n]   (jnp.roll convention)
    if v == 1.0:
        return False       # out[i] = x[(i + shift) % n]
    raise RuntimeError(f"Unexpected pltpu.roll probe result: {v}")


# --------------------------------------------------------------------------- #
# Kernel
# --------------------------------------------------------------------------- #
def _make_kernel(hw: int, offsets, roll_like_jnp: bool):
    def kernel(x_ref, w_ref, beff_ref, rscale_ref, mask_ref, o_ref):
        # x_ref: (1, HW, C) f32      w_ref: (9, 9*C, C) bf16 (BN scale folded)
        # beff/rscale: (9, 1, C) f32 mask_ref: (9, HW, 1) f32
        x = x_ref[0]                                  # (HW, C) f32
        res = x

        # Hoist the tiny per-tap boundary masks out of the layer loop.
        tap_masks = [None if off == 0 else mask_ref[t]
                     for t, off in enumerate(offsets)]

        for l in range(NUM_LAYERS):
            # im2col: 9 rolled+masked copies of x concatenated along lanes.
            cols = []
            for t, off in enumerate(offsets):
                if off == 0:                          # center tap: no shift/mask
                    col = x
                else:
                    s = (-off) % hw if roll_like_jnp else off % hw
                    col = pltpu.roll(x, shift=s, axis=0) * tap_masks[t]
                cols.append(col.astype(jnp.bfloat16))
            patch = jnp.concatenate(cols, axis=1)     # (HW, 9*C) bf16

            # Single wide-K MXU matmul per layer, f32 accumulation.
            z = jnp.dot(patch, w_ref[l], preferred_element_type=jnp.float32)
            z = z + beff_ref[l]                       # conv bias * s + BN shift

            if l == 2:                                # x = lrelu(BN(conv(x)) + res)
                z = z + res
            elif l in (5, 8):                         # x = lrelu(BN(conv(x) + res))
                z = z + res * rscale_ref[l]

            x = jnp.maximum(z, NEG_SLOPE * z)         # LeakyReLU(0.2)

            if l in (2, 5):                           # res = x after blocks 1 & 2
                res = x

        o_ref[0] = x

    return kernel


# --------------------------------------------------------------------------- #
# Wrapper
# --------------------------------------------------------------------------- #
def res_class_forward(x, params):
    """x: (N, C, H, W) float32; params: dict of stacked per-layer parameters."""
    N, C, H, W = x.shape
    HW = H * W

    conv_w = params["conv_w"]   # (9, Cout, Cin, 3, 3)  (PyTorch layout)
    conv_b = params["conv_b"]   # (9, C)
    gamma = params["gamma"]     # (9, C)
    beta = params["beta"]       # (9, C)
    mean = params["mean"]       # (9, C)
    var = params["var"]         # (9, C)

    # Fold BatchNorm (eval mode) into the conv: scale s into output channels of
    # the weights, shift into an effective bias.
    s = gamma / jnp.sqrt(var + EPS)                             # (9, C)
    bshift = beta - mean * s                                    # (9, C)
    wt = jnp.transpose(conv_w, (0, 3, 4, 2, 1)).reshape(NUM_LAYERS, 9, C, C)
    # (L, tap, Cin, Cout) * s -> flatten (tap, Cin) into a single K=9*C axis.
    wf = (wt * s[:, None, None, :]).reshape(NUM_LAYERS, 9 * C, C)
    wf = wf.astype(jnp.bfloat16)                                # bf16 MXU weights
    beff = (conv_b * s + bshift).reshape(NUM_LAYERS, 1, C).astype(jnp.float32)
    rscale = s.reshape(NUM_LAYERS, 1, C).astype(jnp.float32)    # layers 6, 9

    masks = _build_tap_masks(H, W)                              # (9, HW, 1)
    offsets = _tap_offsets(W)

    # NCHW -> (N, H*W, C): channels on lanes, spatial rows on sublanes.
    xr = jnp.transpose(x, (0, 2, 3, 1)).reshape(N, HW, C).astype(jnp.float32)

    kernel = _make_kernel(HW, offsets, _roll_matches_jnp())

    out = pl.pallas_call(
        kernel,
        out_shape=jax.ShapeDtypeStruct((N, HW, C), jnp.float32),
        grid_spec=pltpu.PrefetchScalarGridSpec(
            num_scalar_prefetch=0,
            grid=(N,),
            in_specs=[
                pl.BlockSpec((1, HW, C), lambda n: (n, 0, 0)),
                pl.BlockSpec((NUM_LAYERS, 9 * C, C), lambda n: (0, 0, 0)),
                pl.BlockSpec((NUM_LAYERS, 1, C), lambda n: (0, 0, 0)),
                pl.BlockSpec((NUM_LAYERS, 1, C), lambda n: (0, 0, 0)),
                pl.BlockSpec((9, HW, 1), lambda n: (0, 0, 0)),
            ],
            out_specs=pl.BlockSpec((1, HW, C), lambda n: (n, 0, 0)),
        ),
        compiler_params=pltpu.CompilerParams(
            dimension_semantics=("parallel",),
            vmem_limit_bytes=32 * 1024 * 1024,
        ),
    )(xr, wf, beff, rscale, masks)

    # back to NCHW
    return jnp.transpose(out.reshape(N, H, W, C), (0, 3, 1, 2))


# --------------------------------------------------------------------------- #
# Pure-JAX f32 reference (eval-mode BN), mirroring the PyTorch forward exactly
# --------------------------------------------------------------------------- #
def _reference(x, params):
    conv_w, conv_b = params["conv_w"], params["conv_b"]
    gamma, beta, mean, var = params["gamma"], params["beta"], params["mean"], params["var"]

    def conv(h, l):
        y = lax.conv_general_dilated(
            h, conv_w[l], window_strides=(1, 1), padding=((1, 1), (1, 1)),
            dimension_numbers=("NCHW", "OIHW", "NCHW"))
        return y + conv_b[l][None, :, None, None]

    def bn(h, l):
        sc = gamma[l] / jnp.sqrt(var[l] + EPS)
        return (h - mean[l][None, :, None, None]) * sc[None, :, None, None] \
            + beta[l][None, :, None, None]

    def lrelu(h):
        return jnp.where(h >= 0, h, NEG_SLOPE * h)

    h = x
    res = h
    h = lrelu(bn(conv(h, 0), 0))
    h = lrelu(bn(conv(h, 1), 1))
    h = lrelu(bn(conv(h, 2), 2) + res)
    res = h
    h = lrelu(bn(conv(h, 3), 3))
    h = lrelu(bn(conv(h, 4), 4))
    h = lrelu(bn(conv(h, 5) + res, 5))
    res = h
    h = lrelu(bn(conv(h, 6), 6))
    h = lrelu(bn(conv(h, 7), 7))
    h = lrelu(bn(conv(h, 8) + res, 8))
    return h


# --------------------------------------------------------------------------- #
if __name__ == "__main__":
    # Small test: NDF*8 = 128 channels (NDF=16), 16x16 spatial, batch=2.
    N, C, H, W = 2, 128, 16, 16
    key = jax.random.PRNGKey(0)
    ks = jax.random.split(key, 7)

    x = jax.random.normal(ks[0], (N, C, H, W), jnp.float32)

    fan = C * 9  # fan_in = fan_out for Cin=Cout=C, 3x3 (xavier_normal_)
    w_std = (2.0 / (fan + fan)) ** 0.5
    conv_w = jax.random.normal(ks[1], (NUM_LAYERS, C, C, 3, 3), jnp.float32) * w_std
    conv_b = jax.random.normal(ks[2], (NUM_LAYERS, C), jnp.float32) * 0.05
    gamma = 1.0 + 0.2 * jax.random.normal(ks[3], (NUM_LAYERS, C), jnp.float32)
    beta = 0.1 * jax.random.normal(ks[4], (NUM_LAYERS, C), jnp.float32)
    mean = 0.1 * jax.random.normal(ks[5], (NUM_LAYERS, C), jnp.float32)
    var = jax.random.uniform(ks[6], (NUM_LAYERS, C), jnp.float32, 0.5, 1.5)

    params = dict(conv_w=conv_w, conv_b=conv_b, gamma=gamma, beta=beta,
                  mean=mean, var=var)

    out = res_class_forward(x, params)
    jax.block_until_ready(out)

    ref = _reference(x, params)
    assert out.shape == (N, C, H, W)
    # Tolerance relaxed vs. the pure-f32 version: MXU operands are bf16
    # (f32 accumulation), so ~1e-2 absolute error is expected after 9 layers.
    np.testing.assert_allclose(np.asarray(out), np.asarray(ref),
                               rtol=5e-2, atol=5e-2)

    print("KERNEL_OK")
</pallas_src>

<mosaic_0001>
module attributes {stable_mosaic.version = 11 : i64} {
  func.func @probe(%arg0: memref<8x128xf32, #tpu.memory_space<vmem>>, %arg1: memref<8x128xf32, #tpu.memory_space<vmem>>) attributes {dimension_semantics = [], scalar_prefetch = 0 : i64, scratch_operands = 0 : i64, tpu.core_type = #tpu.core_type<tc>} {
    %c0 = arith.constant 0 : index
    %c0_0 = arith.constant 0 : index
    %0 = vector.load %arg0[%c0, %c0_0] : memref<8x128xf32, #tpu.memory_space<vmem>>, vector<8x128xf32>
    %c1_i32 = arith.constant 1 : i32
    %1 = tpu.dynamic_rotate %0 by %c1_i32 dim 0 : vector<8x128xf32>, i32 -> vector<8x128xf32>
    %c0_1 = arith.constant 0 : index
    %c0_2 = arith.constant 0 : index
    %2 = vector.load %arg1[%c0_1, %c0_2] : memref<8x128xf32, #tpu.memory_space<vmem>>, vector<8x128xf32>
    tpu.vector_store %arg1[%c0_1, %c0_2], %1 {strides = array<i32>} : memref<8x128xf32, #tpu.memory_space<vmem>>, vector<8x128xf32>,
    return
  }
}

</mosaic_0001>

<llo_original>
// kernel: tpu_custom_call.1
$region0: #{tpu_custom_call.1}
  #allocation0 [shape = 'u32[]', space=smem, size = 0x4, offset = 0x4, fixed_abs, tag = 'smem constant byte address 0x4 - core index']
  #allocation1 [shape = 'u32[72,128]{1,0:T(1,128)}', space=vmem, size = 0x9000, scoped, tag = 'internal scratch']
  %s0 = inlined_call_operand.hbm [shape: f32[8,128], index: 0, kind: input, shape index: {}]
  %s1 = inlined_call_operand.hbm [shape: f32[8,128], index: 1, kind: output, shape index: {}]
  %s2 = sld [smem:[#allocation0]]
  $region18: #{tpu_custom_call.1} parent=0
    _
  %s4 = ssub.s32 1, %s2
  %s5 = scalar_select 0, %s4, %s2
  $region1: #{tpu_custom_call.1} parent=0
    #allocation2 [shape = 'u8[4096]{0}', space=vmem, size = 0x1000, scoped, tag = 'input window, operand 0, single buffered']
    #allocation3 [shape = 's32[1]{0}', space=sflag, size = 0x4, scoped, tag = 'scoped memory for tpu_custom_call.1']
    #allocation4 [shape = 's32[1]{0}', space=sflag, size = 0x4, scoped, tag = 'scoped memory for tpu_custom_call.1']
    #allocation5 [shape = 'u8[4096]{0}', space=vmem, size = 0x1000, scoped, tag = 'output window, operand 0, single buffered']
    %6 = vsyncpa [#allocation3], 0
    %7 = vsyncpa [#allocation4], 0
    // Predicated region
    $region2: #{tpu_custom_call.1} parent=1 // pred_check
      _
    $region3: #{tpu_custom_call.1} parent=1 // pred_check_branch
      %9 = sbr.rel (0) target = $region5
    $region4: #{tpu_custom_call.1} parent=1 // pred_region
      %11 = vsyncadd [#allocation3], 0
      %s13 = sshll.u32 %s0, 4
      %s14 = int_to_ptr.hbm [resolvable:$true] %s13
      %s15 = sshll.u32 [#allocation2], 4
      %s16 = int_to_ptr.vmem [resolvable:$true] %s15
      %18 = dma.hbm_to_vmem [thread:$0]  %s14, 128, %s16, [#allocation3]
    $region5: #{tpu_custom_call.1} parent=1 // pred_fallthru
      _
    // Predicated region
    $region6: #{tpu_custom_call.1} parent=1 // pred_check
      _
    $region7: #{tpu_custom_call.1} parent=1 // pred_check_branch
      %20 = sbr.rel (0) target = $region9
    $region8: #{tpu_custom_call.1} parent=1 // pred_region
      %22 = dma.done [#allocation3], 128
    $region9: #{tpu_custom_call.1} parent=1 // pred_fallthru
      _
    %v23 = vld [vmem:[#allocation2] sm:$0xff]
    %v24 = vrot.slane %v23, 7
    %25 = vst [vmem:[#allocation5] sm:$0xff] %v24
    // Predicated region
    $region10: #{tpu_custom_call.1} parent=1 // pred_check
      _
    $region11: #{tpu_custom_call.1} parent=1 // pred_check_branch
      %27 = sbr.rel (0) target = $region13
    $region12: #{tpu_custom_call.1} parent=1 // pred_region
      %29 = vsyncadd [#allocation4], 0
      %s31 = sshll.u32 [#allocation5], 4
      %s32 = int_to_ptr.vmem [resolvable:$true] %s31
      %s33 = sshll.u32 %s1, 4
      %s34 = int_to_ptr.hbm [resolvable:$true] %s33
      %36 = dma.vmem_to_hbm [thread:$0]  %s32, 128, %s34, [#allocation4]
    $region13: #{tpu_custom_call.1} parent=1 // pred_fallthru
      _
    // Predicated region
    $region14: #{tpu_custom_call.1} parent=1 // pred_check
      _
    $region15: #{tpu_custom_call.1} parent=1 // pred_check_branch
      %38 = sbr.rel (0) target = $region17
    $region16: #{tpu_custom_call.1} parent=1 // pred_region
      %40 = dma.done [#allocation4], 128
    $region17: #{tpu_custom_call.1} parent=1 // pred_fallthru
      _
    %41 = vsyncpa [#allocation3], 1
    %42 = vsyncpa [#allocation4], 1

</llo_original>
